<compile_context>
chip_gen: v7x
topology: tpu7x:2x2x1
jax: 0.10.0
libtpu: 0.0.40
codegen_flags: <defaults>
</compile_context>

<pallas_src>
import jax
import jax.numpy as jnp
from jax import lax
from jax.experimental import pallas as pl
from jax.experimental.pallas import tpu as pltpu

C_IN = 2
C_OUT = 4
GROUPS = 2
KSIZE = 1
STRIDE = 2
PAD = 1
OUT_PER_GROUP = C_OUT // GROUPS  # 2
LANE = 128
# (C_OUT input rows + C_OUT output rows) * 32768 lanes * 4 B = 1 MiB per step.
MAX_TILE_L = 32768


def _cdiv(a, b):
    return -(-a // b)


def _round_up(x, m):
    return _cdiv(x, m) * m


def _choose_l_tiling(n, l_out):
    """Pick (tile_l, ntiles, padded_L) for the L_out axis.

    - tile_l is a multiple of 128 lanes and capped at MAX_TILE_L,
    - enough L-tiles that n * ntiles gives >= ~4 grid steps when the problem
      is big enough (v7x megacore sharding via the "parallel" axes),
    - padding waste is bounded by ~128 lanes per tile (not per problem).
    """
    lp0 = _round_up(max(l_out, 1), LANE)
    want_steps = 4
    min_l_tiles = min(max(1, _cdiv(want_steps, max(n, 1))), lp0 // LANE)
    ntiles = max(_cdiv(lp0, MAX_TILE_L), min_l_tiles, 1)
    tile_l = _round_up(_cdiv(lp0, ntiles), LANE)
    lp = tile_l * ntiles
    return tile_l, ntiles, lp


def conv1x1_tanh_kernel(x_ref, wb_ref, o_ref):
    # x_ref : (C_OUT, TILE_L) f32 -- strided/padded input with channels
    #         pre-replicated so row oc already holds input channel oc//2.
    # wb_ref: (C_OUT, 2) f32 -- column 0 = weight, column 1 = bias.
    # o_ref : (C_OUT, TILE_L) f32
    wb = wb_ref[...]
    w = wb[:, 0:1]                    # (C_OUT, 1)
    b = wb[:, 1:2]                    # (C_OUT, 1)
    # Single fused, lane-dense elementwise expression and a single store.
    o_ref[...] = jnp.tanh(x_ref[...] * w + b)


def model_tanh_forward(x, weight, bias):
    """x: (N, C_IN, L) float32. weight: (C_OUT, 1, 1). bias: (C_OUT,)."""
    n, c_in, L = x.shape
    assert c_in == C_IN
    l_out = (L + 2 * PAD - KSIZE) // STRIDE + 1
    tile_l, ntiles, lp = _choose_l_tiling(n, l_out)

    # ---- wrapper glue: pad + stride-2 gather + grouped-channel replication.
    # One fusible producer chain in native (N, C, L) layout (no transposes);
    # allow_input_fusion below lets XLA fold it into the kernel input load.
    x_pad = jnp.pad(x, ((0, 0), (0, 0), (PAD, PAD)))
    x_gather = x_pad[:, :, ::STRIDE][:, :, :l_out]            # (N, C_IN, L_out)
    x_rep = jnp.repeat(x_gather, OUT_PER_GROUP, axis=1)       # (N, C_OUT, L_out)
    x_rep = jnp.pad(x_rep, ((0, 0), (0, 0), (0, lp - l_out)))  # lane pad

    # Pack weight & bias into one tiny (C_OUT, 2) operand.
    wb = jnp.stack(
        [weight.reshape(C_OUT).astype(jnp.float32),
         bias.reshape(C_OUT).astype(jnp.float32)], axis=1)     # (C_OUT, 2)

    out_padded = pl.pallas_call(
        conv1x1_tanh_kernel,
        out_shape=jax.ShapeDtypeStruct((n, C_OUT, lp), jnp.float32),
        grid_spec=pltpu.PrefetchScalarGridSpec(
            num_scalar_prefetch=0,
            grid=(n, ntiles),
            in_specs=[
                pl.BlockSpec((None, C_OUT, tile_l), lambda i, j: (i, 0, j)),
                pl.BlockSpec((C_OUT, 2), lambda i, j: (0, 0)),
            ],
            out_specs=pl.BlockSpec((None, C_OUT, tile_l), lambda i, j: (i, 0, j)),
        ),
        compiler_params=pltpu.CompilerParams(
            dimension_semantics=("parallel", "parallel"),
            allow_input_fusion=[True, False],
        ),
    )(x_rep, wb)

    # Only post-processing: slice off the lane padding (native layout kept).
    return out_padded[:, :, :l_out]


def reference_forward(x, weight, bias):
    """Pure-JAX reference using lax conv (matches PyTorch Conv1d semantics)."""
    y = lax.conv_general_dilated(
        x, weight,
        window_strides=(STRIDE,),
        padding=((PAD, PAD),),
        dimension_numbers=("NCH", "OIH", "NCH"),
        feature_group_count=GROUPS,
    )
    return jnp.tanh(y + bias[None, :, None])


if __name__ == "__main__":
    key = jax.random.PRNGKey(0)
    kx, kw, kb = jax.random.split(key, 3)

    # Small shapes consistent with the module: (N=2, C_in=2, L=16)
    N, L = 2, 16
    x = jax.random.normal(kx, (N, C_IN, L), dtype=jnp.float32)

    # PyTorch-style uniform init, bound = 1/sqrt(fan_in), fan_in = 1*1 = 1
    bound = 1.0
    weight = jax.random.uniform(kw, (C_OUT, C_IN // GROUPS, KSIZE),
                                minval=-bound, maxval=bound, dtype=jnp.float32)
    bias = jax.random.uniform(kb, (C_OUT,), minval=-bound, maxval=bound,
                              dtype=jnp.float32)

    out = jax.block_until_ready(model_tanh_forward(x, weight, bias))
    ref = jax.block_until_ready(reference_forward(x, weight, bias))
    assert out.shape == ref.shape, (out.shape, ref.shape)
    assert jnp.allclose(out, ref, atol=1e-5, rtol=1e-5), "mismatch vs reference"

    print("KERNEL_OK")
</pallas_src>

<mosaic_0001>
module attributes {stable_mosaic.version = 11 : i64} {
  func.func @conv1x1_tanh_kernel(%arg0: i32, %arg1: i32, %arg2: memref<1x4x128xf32, #tpu.memory_space<vmem>>, %arg3: memref<4x2xf32, #tpu.memory_space<vmem>>, %arg4: memref<1x4x128xf32, #tpu.memory_space<vmem>>) attributes {dimension_semantics = [#tpu.dimension_semantics<parallel>, #tpu.dimension_semantics<parallel>], iteration_bounds = array<i64: 2, 1>, scalar_prefetch = 0 : i64, scratch_operands = 0 : i64, tpu.core_type = #tpu.core_type<tc>, window_params = [{transform_indices = @transform_0, window_bounds = array<i64: 1, 4, 128>}, {pipeline_mode = #tpu.pipeline_mode<synchronous>, transform_indices = @transform_1, window_bounds = array<i64: 4, 2>}, {transform_indices = @transform_2, window_bounds = array<i64: 1, 4, 128>}]} {
    %c0 = arith.constant 0 : index
    %c0_0 = arith.constant 0 : index
    %0 = vector.load %arg3[%c0, %c0_0] : memref<4x2xf32, #tpu.memory_space<vmem>>, vector<4x2xf32>
    %1 = vector.extract_strided_slice %0 {offsets = [0, 0], sizes = [4, 1], strides = [1, 1]} : vector<4x2xf32> to vector<4x1xf32>
    %2 = vector.extract_strided_slice %0 {offsets = [0, 1], sizes = [4, 1], strides = [1, 1]} : vector<4x2xf32> to vector<4x1xf32>
    %c0_1 = arith.constant 0 : index
    %c0_2 = arith.constant 0 : index
    %c0_3 = arith.constant 0 : index
    %3 = vector.load %arg2[%c0_1, %c0_2, %c0_3] : memref<1x4x128xf32, #tpu.memory_space<vmem>>, vector<1x4x128xf32>
    %4 = vector.shape_cast %3 : vector<1x4x128xf32> to vector<4x128xf32>
    %5 = vector.broadcast %1 : vector<4x1xf32> to vector<4x128xf32>
    %6 = arith.mulf %4, %5 : vector<4x128xf32>
    %7 = vector.broadcast %2 : vector<4x1xf32> to vector<4x128xf32>
    %8 = arith.addf %6, %7 : vector<4x128xf32>
    %9 = math.tanh %8 : vector<4x128xf32>
    %c0_4 = arith.constant 0 : index
    %c0_5 = arith.constant 0 : index
    %c0_6 = arith.constant 0 : index
    %10 = vector.load %arg4[%c0_4, %c0_5, %c0_6] : memref<1x4x128xf32, #tpu.memory_space<vmem>>, vector<1x4x128xf32>
    %11 = vector.shape_cast %10 : vector<1x4x128xf32> to vector<4x128xf32>
    %12 = vector.shape_cast %9 : vector<4x128xf32> to vector<1x4x128xf32>
    tpu.vector_store %arg4[%c0_4, %c0_5, %c0_6], %12 {strides = array<i32>} : memref<1x4x128xf32, #tpu.memory_space<vmem>>, vector<1x4x128xf32>,
    return
  }
  func.func @transform_0(%arg0: i32, %arg1: i32) -> (i32, i32, i32) {
    %c0_i32 = arith.constant 0 : i32
    %c0_i32_0 = arith.constant 0 : i32
    return %arg0, %c0_i32, %arg1 : i32, i32, i32
  }
  func.func @transform_1(%arg0: i32, %arg1: i32) -> (i32, i32) {
    %c0_i32 = arith.constant 0 : i32
    %c0_i32_0 = arith.constant 0 : i32
    %c0_i32_1 = arith.constant 0 : i32
    return %c0_i32, %c0_i32_0 : i32, i32
  }
  func.func @transform_2(%arg0: i32, %arg1: i32) -> (i32, i32, i32) {
    %c0_i32 = arith.constant 0 : i32
    %c0_i32_0 = arith.constant 0 : i32
    return %arg0, %c0_i32, %arg1 : i32, i32, i32
  }
}

</mosaic_0001>

<llo_original>
// kernel: tpu_custom_call.1
$region0: #{tpu_custom_call.1}
  #allocation0 [shape = 'u32[]', space=smem, size = 0x4, offset = 0x4, fixed_abs, tag = 'smem constant byte address 0x4 - core index']
  #allocation1 [shape = 'u32[144,128]{1,0:T(1,128)}', space=vmem, size = 0x12000, scoped, tag = 'internal scratch']
  %s0 = inlined_call_operand.hbm [shape: f32[2,4,128], index: 0, kind: input, shape index: {}]
  %s1 = inlined_call_operand.vmem [shape: f32[4,2], index: 1, kind: input, shape index: {}]
  %s2 = inlined_call_operand.hbm [shape: f32[2,4,128], index: 2, kind: output, shape index: {}]
  %s3 = sld [smem:[#allocation0]]
  $region45: #{tpu_custom_call.1} parent=0
    _
  %s5 = ssub.s32 1, %s3
  %s6 = scalar_select 0, %s5, %s3
  $region1: #{tpu_custom_call.1} parent=0
    #allocation2 [shape = 'u8[4096]{0}', space=vmem, size = 0x1000, scoped, tag = 'input window, operand 0']
    #allocation3 [shape = 's32[2]{0}', space=sflag, size = 0x8, scoped, tag = 'scoped memory for tpu_custom_call.1']
    #allocation4 [shape = 's32[2]{0}', space=sflag, size = 0x8, scoped, tag = 'scoped memory for tpu_custom_call.1']
    #allocation5 [shape = 'u8[4096]{0}', space=vmem, size = 0x1000, scoped, tag = 'output window, operand 0']
    %7 = vsyncpa [#allocation3], 0
    %s8 = scalar_lea.sflag [#allocation3], 1
    %9 = vsyncpa %s8, 0
    %10 = vsyncpa [#allocation4], 0
    %s11 = scalar_lea.sflag [#allocation4], 1
    %12 = vsyncpa %s11, 0
    loop: start=0, step=1, limit=4
    $region2: #{tpu_custom_call.1} parent=1 // loop_pre_header
      _
    $region3: #{tpu_custom_call.1} parent=1 // loop_header
      %s14 = sphi 0, %s18
      %p15 = scmp.ge.s32.totalorder %s14, 4
      %s21 = sphi 0, %s33
      %s22 = sphi 0, %s29
      %s23 = sphi 0, %s21
      %s24 = sphi 0, %s22
      %s25 = sphi 0, %s23
      %s26 = sphi 0, %s24
      %s38 = sphi 0, %s40
      %s41 = sphi 0, %s38
      %s42 = sphi 0, %s41
      %s58 = sphi 0, %s42
      %s62 = sphi 0, %s62
      %s64 = sphi 0, %s62
      %s65 = sphi 0, %s64
      %s79 = sphi 0, %s65
      %s87 = sphi 0, %s89
      %s90 = sphi 0, %s87
      %s91 = sphi 0, %s90
      %s107 = sphi 0, %s91
    $region4: #{tpu_custom_call.1} parent=1 // loop_header_branch
      %17 = sbr.rel (%p15) target = $region8
    $region5: #{tpu_custom_call.1} parent=1 // loop_body
      %s19 = ssub.s32 %s14, 1
      %s20 = ssub.s32 %s14, 2
      %s27 = sadd.s32 1, %s22
      %p28 = scmp.ge.s32.totalorder %s27, 1
      %s29 = scalar_select %p28, 0, %s27
      %s30 = sadd.s32 1, %s21
      %s31 = scalar_select %p28, %s30, %s21
      %p32 = scmp.ge.s32.totalorder %s31, 2
      %s33 = scalar_select %p32, 0, %s31
      %s34 = ssub.s32 %s21, %s33
      %s35 = ssub.s32 %s22, %s29
      %s36 = sor.u32 %s34, %s35
      %p37 = scmp.eq.s32.totalorder %s36, 0
      %s39 = sadd.s32 %s38, 1
      %s40 = scalar_select %p37, %s38, %s39
      %p43 = pneg %p37
      %p44 = scmp.eq.s32.totalorder %s14, 1
      %p45 = por %p43, %p44
      %p46 = scmp.ne.s32.totalorder %s38, %s41
      %p47 = scmp.eq.s32.totalorder %s14, 0
      %p48 = por %p46, %p47
      %p49 = scmp.ne.s32.totalorder %s38, %s41
      %p50 = scmp.eq.s32.totalorder %s19, 1
      %p51 = por %p49, %p50
      %p52 = scmp.ne.s32.totalorder %s41, %s42
      %p53 = scmp.eq.s32.totalorder %s19, 0
      %p54 = por %p52, %p53
      %p55 = scmp.ne.s32.totalorder %s41, %s42
      %p56 = scmp.eq.s32.totalorder %s20, 1
      %p57 = por %p55, %p56
      %p59 = scmp.ne.s32.totalorder %s42, %s58
      %p60 = scmp.eq.s32.totalorder %s20, 0
      %p61 = por %p59, %p60
      %s63 = sadd.s32 %s62, 1
      %p66 = scmp.eq.s32.totalorder %s14, 1
      %p67 = scmp.ne.s32.totalorder %s62, %s64
      %p68 = scmp.eq.s32.totalorder %s14, 0
      %p69 = por %p67, %p68
      %p70 = scmp.ne.s32.totalorder %s62, %s64
      %p71 = scmp.eq.s32.totalorder %s19, 1
      %p72 = por %p70, %p71
      %p73 = scmp.ne.s32.totalorder %s64, %s65
      %p74 = scmp.eq.s32.totalorder %s19, 0
      %p75 = por %p73, %p74
      %p76 = scmp.ne.s32.totalorder %s64, %s65
      %p77 = scmp.eq.s32.totalorder %s20, 1
      %p78 = por %p76, %p77
      %p80 = scmp.ne.s32.totalorder %s65, %s79
      %p81 = scmp.eq.s32.totalorder %s20, 0
      %p82 = por %p80, %p81
      %s83 = ssub.s32 %s21, %s33
      %s84 = ssub.s32 %s22, %s29
      %s85 = sor.u32 %s83, %s84
      %p86 = scmp.eq.s32.totalorder %s85, 0
      %s88 = sadd.s32 %s87, 1
      %s89 = scalar_select %p86, %s87, %s88
      %p92 = pneg %p86
      %p93 = scmp.eq.s32.totalorder %s14, 1
      %p94 = por %p92, %p93
      %p95 = scmp.ne.s32.totalorder %s87, %s90
      %p96 = scmp.eq.s32.totalorder %s14, 0
      %p97 = por %p95, %p96
      %p98 = scmp.ne.s32.totalorder %s87, %s90
      %p99 = scmp.eq.s32.totalorder %s19, 1
      %p100 = por %p98, %p99
      %p101 = scmp.ne.s32.totalorder %s90, %s91
      %p102 = scmp.eq.s32.totalorder %s19, 0
      %p103 = por %p101, %p102
      %p104 = scmp.ne.s32.totalorder %s90, %s91
      %p105 = scmp.eq.s32.totalorder %s20, 1
      %p106 = por %p104, %p105
      %p108 = scmp.ne.s32.totalorder %s91, %s107
      %p109 = scmp.eq.s32.totalorder %s20, 0
      %p110 = por %p108, %p109
      %p111 = scmp.le.s32.totalorder 1, %s14
      %p112 = scmp.lt.s32.totalorder %s14, 3
      %p113 = pnand %p111, %p112
      %p114 = pneg %p113
      // Predicated region
      $region9: #{tpu_custom_call.1} parent=5 // pred_check
        _
      $region10: #{tpu_custom_call.1} parent=5 // pred_check_branch
        %116 = sbr.rel (%p113) target = $region12
      $region11: #{tpu_custom_call.1} parent=5 // pred_region
        %s117 = ssub.s32 %s14, 1
        // Predicated region
        $region13: #{tpu_custom_call.1} parent=11 // pred_check
          %p118 = pneg %p75
        $region14: #{tpu_custom_call.1} parent=11 // pred_check_branch
          %120 = sbr.rel (%p118) target = $region16
        $region15: #{tpu_custom_call.1} parent=11 // pred_region
          _
        $region16: #{tpu_custom_call.1} parent=11 // pred_fallthru
          _
      $region12: #{tpu_custom_call.1} parent=5 // pred_fallthru
        _
      %p121 = scmp.lt.s32.totalorder %s14, 2
      // Predicated region
      $region17: #{tpu_custom_call.1} parent=5 // pred_check
        %p122 = pneg %p121
      $region18: #{tpu_custom_call.1} parent=5 // pred_check_branch
        %124 = sbr.rel (%p122) target = $region20
      $region19: #{tpu_custom_call.1} parent=5 // pred_region
        // Predicated region
        $region21: #{tpu_custom_call.1} parent=19 // pred_check
          %p125 = pneg %p48
        $region22: #{tpu_custom_call.1} parent=19 // pred_check_branch
          %127 = sbr.rel (%p125) target = $region24
        $region23: #{tpu_custom_call.1} parent=19 // pred_region
          %s128 = sand.u32 %s38, 1
          %s129 = scalar_lea.sflag [#allocation3], %s128
          %s130 = sand.u32 %s38, 1
          %s131 = smul.addr %s130, 4
          %s132 = scalar_lea.vmem [#allocation2], %s131
          %s134 = ssub.s32 64, 64
          %135 = vsyncadd %s129, %s134
          %s136 = sadd.s32 %s22, %s21
          %s137 = smul.addr %s136, 64
          %s138 = scalar_lea.hbm %s0, %s137
          %s140 = sshll.u32 %s132, 4
          %s141 = int_to_ptr.vmem [resolvable:$true] %s140
          %143 = dma.hbm_to_vmem [thread:$0]  %s138, 64, %s141, %s129
        $region24: #{tpu_custom_call.1} parent=19 // pred_fallthru
          _
      $region20: #{tpu_custom_call.1} parent=5 // pred_fallthru
        _
      %p144 = scmp.le.s32.totalorder 1, %s14
      %p145 = scmp.lt.s32.totalorder %s14, 3
      %p146 = pnand %p144, %p145
      %p147 = pneg %p146
      // Predicated region
      $region25: #{tpu_custom_call.1} parent=5 // pred_check
        _
      $region26: #{tpu_custom_call.1} parent=5 // pred_check_branch
        %149 = sbr.rel (%p146) target = $region28
      $region27: #{tpu_custom_call.1} parent=5 // pred_region
        %s150 = ssub.s32 %s14, 1
        %s151 = sand.u32 %s41, 1
        %s152 = scalar_lea.sflag [#allocation3], %s151
        %s153 = sand.u32 %s41, 1
        %s154 = smul.addr %s153, 4
        %s155 = scalar_lea.vmem [#allocation2], %s154
        // Predicated region
        $region29: #{tpu_custom_call.1} parent=27 // pred_check
          %p156 = pneg %p54
        $region30: #{tpu_custom_call.1} parent=27 // pred_check_branch
          %158 = sbr.rel (%p156) target = $region32
        $region31: #{tpu_custom_call.1} parent=27 // pred_region
          %159 = dma.done %s152, 64
        $region32: #{tpu_custom_call.1} parent=27 // pred_fallthru
          _
        %s160 = sand.u32 %s41, 1
        %s161 = scalar_lea.sflag [#allocation3], %s160
        %s162 = sand.u32 %s41, 1
        %s163 = smul.addr %s162, 4
        %s164 = scalar_lea.vmem [#allocation2], %s163
        %p165 = pneg %p54
        %p166 = pneg %p51
        %p167 = pneg %p75
        %p168 = pneg %p72
        %p169 = pneg %p103
        %p170 = pneg %p100
        %s171 = sand.u32 %s90, 1
        %s172 = scalar_lea.sflag [#allocation4], %s171
        %s173 = sand.u32 %s90, 1
        %s174 = smul.addr %s173, 4
        %s175 = scalar_lea.vmem [#allocation5], %s174
        %v176 = vld [vmem:[%s1] sm:$0xf]
        %v177 = vld [vmem:[%s155] sm:$0xf]
        %179 = vset.pattern.permute.xlu0 0
        %180 = vperm.xlu0 %179, %v176
        %v181 = vpop.permute.xlu0 %180
        %v183 = vmul.f32 %v177, %v181
        %184 = vset.pattern.permute.xlu0 1
        %185 = vperm.xlu0 %184, %v176
        %v186 = vpop.permute.xlu0 %185
        %v188 = vadd.f32 %v183, %v186
        %v189 = vtanh.pop %v188
        %190 = vst [vmem:[%s175] sm:$0xf] %v189
        %s191 = sand.u32 %s90, 1
        %s192 = scalar_lea.sflag [#allocation4], %s191
        %s193 = sand.u32 %s90, 1
        %s194 = smul.addr %s193, 4
        %s195 = scalar_lea.vmem [#allocation5], %s194
        // Predicated region
        $region33: #{tpu_custom_call.1} parent=27 // pred_check
          %p196 = pneg %p100
        $region34: #{tpu_custom_call.1} parent=27 // pred_check_branch
          %198 = sbr.rel (%p196) target = $region36
        $region35: #{tpu_custom_call.1} parent=27 // pred_region
          %s200 = ssub.s32 64, 64
          %201 = vsyncadd %s192, %s200
          %s202 = sadd.s32 %s24, %s23
          %s203 = smul.addr %s202, 64
          %s204 = scalar_lea.hbm %s2, %s203
          %s206 = sshll.u32 %s195, 4
          %s207 = int_to_ptr.vmem [resolvable:$true] %s206
          %209 = dma.vmem_to_hbm [thread:$0]  %s207, 64, %s204, %s192
        $region36: #{tpu_custom_call.1} parent=27 // pred_fallthru
          _
      $region28: #{tpu_custom_call.1} parent=5 // pred_fallthru
        _
      %p210 = scmp.le.s32.totalorder 2, %s14
      // Predicated region
      $region37: #{tpu_custom_call.1} parent=5 // pred_check
        %p211 = pneg %p210
      $region38: #{tpu_custom_call.1} parent=5 // pred_check_branch
        %213 = sbr.rel (%p211) target = $region40
      $region39: #{tpu_custom_call.1} parent=5 // pred_region
        %s214 = ssub.s32 %s14, 2
        // Predicated region
        $region41: #{tpu_custom_call.1} parent=39 // pred_check
          %p215 = pneg %p106
        $region42: #{tpu_custom_call.1} parent=39 // pred_check_branch
          %217 = sbr.rel (%p215) target = $region44
        $region43: #{tpu_custom_call.1} parent=39 // pred_region
          %s218 = sand.u32 %s91, 1
          %s219 = scalar_lea.sflag [#allocation4], %s218
          %s220 = sand.u32 %s91, 1
          %s221 = smul.addr %s220, 4
          %s222 = scalar_lea.vmem [#allocation5], %s221
          %223 = dma.done %s219, 64
        $region44: #{tpu_custom_call.1} parent=39 // pred_fallthru
          _
      $region40: #{tpu_custom_call.1} parent=5 // pred_fallthru
        _
    $region6: #{tpu_custom_call.1} parent=1 // loop_footer
      %s18 = sadd.s32 1, %s14
    $region7: #{tpu_custom_call.1} parent=1 // loop_footer_branch
      %13 = sbr.rel target = $region3
    $region8: #{tpu_custom_call.1} parent=1 // loop_exit
      _
    %224 = vsyncpa [#allocation3], 1
    %s225 = scalar_lea.sflag [#allocation3], 1
    %226 = vsyncpa %s225, 1
    %227 = vsyncpa [#allocation4], 1
    %s228 = scalar_lea.sflag [#allocation4], 1
    %229 = vsyncpa %s228, 1

</llo_original>
